<compile_context>
chip_gen: v7x
topology: tpu7x:2x2x1
jax: 0.10.0
libtpu: 0.0.40
codegen_flags: <defaults>
</compile_context>

<pallas_src>
import jax
import jax.numpy as jnp
from jax.experimental import pallas as pl
from jax.experimental.pallas import tpu as pltpu

LANE = 128


def _round_up(x, m):
    return ((x + m - 1) // m) * m


def _pad2d(a, rows, cols):
    r, c = a.shape
    return jnp.pad(a, ((0, rows - r), (0, cols - c)))


def _choose_block_n(n, requested=None):
    """Row-tile size: multiple of 8; aim for >=4 grid steps (pipeline depth)
    and an even step count (v7x's two TensorCores) whenever n allows it."""
    bn = 1024 if requested is None else requested
    bn = _round_up(max(8, min(bn, n)), 8)
    while bn > 256 and pl.cdiv(n, bn) < 4:
        bn = _round_up(bn // 2, 8)
    if pl.cdiv(n, bn) % 2 == 1 and bn > 128:
        bn = _round_up(bn // 2, 8)
    return bn


# ----------------------------------------------------------------------------
# Pallas kernel: full MLP forward for one row-tile of the batch.
#   refs = (x, wb0, [wb_mid], wb_last, out)
#     x       : (block_n, d0)           concatenated rendering input
#     wb0     : (d0 + 1, h_pad)         layer-0 weight, bias as last row
#     wb_mid  : (n_mid, h_pad+1, h_pad) hidden layers, bias as last row
#     wb_last : (h_pad + 1, LANE)       last layer, output cols zero-padded
#     out     : (block_n, d_out)        lane-narrow store (no padding to HBM)
# ----------------------------------------------------------------------------
def _make_mlp_kernel(d0: int, h_pad: int, n_mid: int, d_out: int,
                     squeeze_out: bool):
    def kernel(*refs):
        if n_mid > 0:
            x_ref, wb0_ref, wbm_ref, wbl_ref, out_ref = refs
        else:
            x_ref, wb0_ref, wbl_ref, out_ref = refs
            wbm_ref = None

        # Layer 0: single K=d0 matmul (inputs pre-concatenated in the wrapper).
        wb0 = wb0_ref[...]
        h = jnp.dot(x_ref[...], wb0[:d0, :],
                    preferred_element_type=jnp.float32) + wb0[d0:d0 + 1, :]
        h = jnp.maximum(h, 0.0)

        # Hidden layers, statically unrolled from the stacked slab.
        for l in range(n_mid):
            wb = wbm_ref[l]                                  # (h_pad+1, h_pad)
            h = jnp.dot(h, wb[:h_pad, :],
                        preferred_element_type=jnp.float32) + wb[h_pad:h_pad + 1, :]
            h = jnp.maximum(h, 0.0)

        # Last layer: compute in padded lanes (VMEM), store only d_out columns.
        wbl = wbl_ref[...]
        h = jnp.dot(h, wbl[:h_pad, :],
                    preferred_element_type=jnp.float32) + wbl[h_pad:h_pad + 1, :]
        h = h[:, :d_out]
        if squeeze_out:
            h = jax.nn.sigmoid(h)
        out_ref[...] = h.astype(out_ref.dtype)

    return kernel


def rendering_network_forward(points, normals, view_dirs, feature_vectors,
                              weights, biases, *, mode="idr",
                              squeeze_out=True, block_n=None):
    """Pallas forward of RenderingNetwork.

    weights: list of effective (already weight-normed) matrices, each [C_in, C_out]
    biases:  list of [C_out] vectors
    """
    if mode == "idr":
        pieces = [points, view_dirs, normals, feature_vectors]
    elif mode == "no_view_dir":
        pieces = [points, normals, feature_vectors]
    elif mode == "no_normal":
        pieces = [points, view_dirs, feature_vectors]
    else:
        raise ValueError(mode)

    # One concatenated input -> one DMA stream, one K=d0 layer-0 matmul.
    x = jnp.concatenate([p.astype(jnp.float32) for p in pieces], axis=-1)
    n, d0 = x.shape
    n_lin = len(weights)
    assert n_lin >= 2, "expected at least layer-0 plus an output layer"
    assert int(weights[0].shape[0]) == d0
    d_hidden = int(weights[0].shape[1])
    d_out = int(weights[-1].shape[1])
    h_pad = _round_up(d_hidden, LANE)
    n_mid = n_lin - 2
    f32 = jnp.float32

    # ---- row tiling ----
    bn = _choose_block_n(n, block_n)
    n_pad = _round_up(n, bn)
    if n_pad != n:
        x = jnp.pad(x, ((0, n_pad - n), (0, 0)))
    grid = (n_pad // bn,)

    # ---- packed weight operands (bias as trailing row). Zero-padding of the
    # hidden width to 128 lanes is exact under ReLU (padded activations stay 0).
    wb0 = jnp.concatenate(
        [_pad2d(weights[0].astype(f32), d0, h_pad),
         _pad2d(biases[0].reshape(1, -1).astype(f32), 1, h_pad)], axis=0)

    operands = [x, wb0]
    in_specs = [
        pl.BlockSpec((bn, d0), lambda i: (i, 0)),
        # Constant block index -> DMA elided after the first grid step.
        pl.BlockSpec((d0 + 1, h_pad), lambda i: (0, 0)),
    ]

    wbm = None
    if n_mid > 0:
        mids = []
        for l in range(1, 1 + n_mid):
            w = _pad2d(weights[l].astype(f32), h_pad, h_pad)
            b = _pad2d(biases[l].reshape(1, -1).astype(f32), 1, h_pad)
            mids.append(jnp.concatenate([w, b], axis=0)[None])
        wbm = jnp.concatenate(mids, axis=0)           # (n_mid, h_pad+1, h_pad)
        operands.append(wbm)
        in_specs.append(
            pl.BlockSpec((n_mid, h_pad + 1, h_pad), lambda i: (0, 0, 0)))

    wbl = jnp.concatenate(
        [_pad2d(weights[-1].astype(f32), h_pad, LANE),
         _pad2d(biases[-1].reshape(1, -1).astype(f32), 1, LANE)], axis=0)
    operands.append(wbl)
    in_specs.append(pl.BlockSpec((h_pad + 1, LANE), lambda i: (0, 0)))

    out_spec = pl.BlockSpec((bn, d_out), lambda i: (i, 0))

    kernel = _make_mlp_kernel(d0, h_pad, n_mid, d_out, squeeze_out)

    # Advisory cost estimate: actual padded HBM traffic + padded MXU work.
    weight_bytes = 4 * (wb0.size + wbl.size + (wbm.size if wbm is not None else 0))
    bytes_accessed = 4 * n_pad * d0 + 4 * n_pad * d_out + int(weight_bytes)
    flops = 2 * n_pad * (d0 * h_pad + n_mid * h_pad * h_pad + h_pad * LANE)
    cost = pl.CostEstimate(flops=int(flops),
                           transcendentals=int(n_pad * d_out) if squeeze_out else 0,
                           bytes_accessed=int(bytes_accessed))

    out = pl.pallas_call(
        kernel,
        out_shape=jax.ShapeDtypeStruct((n_pad, d_out), jnp.float32),
        grid_spec=pltpu.PrefetchScalarGridSpec(
            num_scalar_prefetch=0,
            grid=grid,
            in_specs=in_specs,
            out_specs=out_spec,
        ),
        compiler_params=pltpu.CompilerParams(
            dimension_semantics=("parallel",)),
        cost_estimate=cost,
    )(*operands)

    return out if n_pad == n else out[:n]


# ----------------------------------------------------------------------------
# Deterministic parameter construction (mirrors __init__ shapes + weight_norm)
# ----------------------------------------------------------------------------
def make_params(key, d_feature, d_in, d_out, d_hidden, n_layers):
    dims = [d_in + d_feature] + [d_hidden] * n_layers + [d_out]
    weights, biases = [], []
    for l in range(len(dims) - 1):
        cin, cout = dims[l], dims[l + 1]
        key, k_v, k_g, k_b = jax.random.split(key, 4)
        # v: raw direction, g: per-output-row gain (PyTorch weight_norm dim=0)
        v = jax.random.normal(k_v, (cout, cin), jnp.float32) * 0.2
        g = 0.5 + jax.random.uniform(k_g, (cout, 1), jnp.float32)
        b = jax.random.normal(k_b, (cout,), jnp.float32) * 0.05
        w_eff = g * v / jnp.linalg.norm(v, axis=1, keepdims=True)  # [cout, cin]
        weights.append(w_eff.T)   # stored as [C_in, C_out] for x @ W
        biases.append(b)
    return weights, biases


def reference_forward(points, normals, view_dirs, feats, weights, biases,
                      squeeze_out=True):
    x = jnp.concatenate([points, view_dirs, normals, feats], axis=-1)
    for l, (w, b) in enumerate(zip(weights, biases)):
        x = x @ w + b
        if l < len(weights) - 1:
            x = jnp.maximum(x, 0.0)
    return jax.nn.sigmoid(x) if squeeze_out else x


if __name__ == "__main__":
    # Module-consistent shapes; block_n chooser gives 256 rows -> grid of 4
    # (>=4 pipeline steps, even for v7x's two TensorCores).
    d_feature, d_in, d_out, d_hidden, n_layers = 32, 9, 3, 32, 2
    N = 1024

    key = jax.random.PRNGKey(0)
    key, kp, kn, kv, kf = jax.random.split(key, 5)
    points = jax.random.normal(kp, (N, 3), jnp.float32)
    normals = jax.random.normal(kn, (N, 3), jnp.float32)
    view_dirs = jax.random.normal(kv, (N, 3), jnp.float32)
    feats = jax.random.normal(kf, (N, d_feature), jnp.float32)

    weights, biases = make_params(key, d_feature, d_in, d_out, d_hidden, n_layers)

    out = rendering_network_forward(points, normals, view_dirs, feats,
                                    weights, biases, mode="idr",
                                    squeeze_out=True)
    out = jax.block_until_ready(out)

    ref = reference_forward(points, normals, view_dirs, feats, weights, biases)
    assert out.shape == (N, d_out)
    assert jnp.allclose(out, ref, atol=1e-5, rtol=1e-5), "mismatch vs JAX reference"

    print("KERNEL_OK")
</pallas_src>

<mosaic_0001>
module attributes {stable_mosaic.version = 11 : i64} {
  func.func @kernel(%arg0: i32, %arg1: memref<256x41xf32, #tpu.memory_space<vmem>>, %arg2: memref<42x128xf32, #tpu.memory_space<vmem>>, %arg3: memref<1x129x128xf32, #tpu.memory_space<vmem>>, %arg4: memref<129x128xf32, #tpu.memory_space<vmem>>, %arg5: memref<256x3xf32, #tpu.memory_space<vmem>>) attributes {dimension_semantics = [#tpu.dimension_semantics<parallel>], iteration_bounds = array<i64: 4>, scalar_prefetch = 0 : i64, scratch_operands = 0 : i64, tpu.core_type = #tpu.core_type<tc>, window_params = [{transform_indices = @transform_0, window_bounds = array<i64: 256, 41>}, {pipeline_mode = #tpu.pipeline_mode<synchronous>, transform_indices = @transform_1, window_bounds = array<i64: 42, 128>}, {pipeline_mode = #tpu.pipeline_mode<synchronous>, transform_indices = @transform_2, window_bounds = array<i64: 1, 129, 128>}, {pipeline_mode = #tpu.pipeline_mode<synchronous>, transform_indices = @transform_3, window_bounds = array<i64: 129, 128>}, {transform_indices = @transform_4, window_bounds = array<i64: 256, 3>}]} {
    %c0 = arith.constant 0 : index
    %c0_0 = arith.constant 0 : index
    %0 = vector.load %arg2[%c0, %c0_0] : memref<42x128xf32, #tpu.memory_space<vmem>>, vector<42x128xf32>
    %c0_1 = arith.constant 0 : index
    %c0_2 = arith.constant 0 : index
    %1 = vector.load %arg1[%c0_1, %c0_2] : memref<256x41xf32, #tpu.memory_space<vmem>>, vector<256x41xf32>
    %2 = vector.extract_strided_slice %0 {offsets = [0, 0], sizes = [41, 128], strides = [1, 1]} : vector<42x128xf32> to vector<41x128xf32>
    %cst = arith.constant dense<0.000000e+00> : vector<256x128xf32>
    %3 = tpu.matmul %1, %2, %cst {dimension_numbers = #tpu.dot_dimension_numbers<[1], [0], [0], [1], [0, 0, 1, 1], [], []>} : vector<256x41xf32>, vector<41x128xf32>, vector<256x128xf32> -> vector<256x128xf32>
    %4 = vector.extract_strided_slice %0 {offsets = [41, 0], sizes = [1, 128], strides = [1, 1]} : vector<42x128xf32> to vector<1x128xf32>
    %5 = vector.broadcast %4 : vector<1x128xf32> to vector<256x128xf32>
    %6 = arith.addf %3, %5 : vector<256x128xf32>
    %cst_3 = arith.constant 0.000000e+00 : f32
    %7 = vector.broadcast %cst_3 : f32 to vector<256x128xf32>
    %8 = arith.maximumf %6, %7 : vector<256x128xf32>
    %c0_4 = arith.constant 0 : index
    %c0_5 = arith.constant 0 : index
    %c0_6 = arith.constant 0 : index
    %9 = vector.load %arg3[%c0_4, %c0_5, %c0_6] : memref<1x129x128xf32, #tpu.memory_space<vmem>>, vector<1x129x128xf32>
    %10 = vector.shape_cast %9 : vector<1x129x128xf32> to vector<129x128xf32>
    %11 = vector.extract_strided_slice %10 {offsets = [0, 0], sizes = [128, 128], strides = [1, 1]} : vector<129x128xf32> to vector<128x128xf32>
    %cst_7 = arith.constant dense<0.000000e+00> : vector<256x128xf32>
    %12 = tpu.matmul %8, %11, %cst_7 {dimension_numbers = #tpu.dot_dimension_numbers<[1], [0], [0], [1], [0, 0, 1, 1], [], []>} : vector<256x128xf32>, vector<128x128xf32>, vector<256x128xf32> -> vector<256x128xf32>
    %13 = vector.extract_strided_slice %10 {offsets = [128, 0], sizes = [1, 128], strides = [1, 1]} : vector<129x128xf32> to vector<1x128xf32>
    %14 = vector.broadcast %13 : vector<1x128xf32> to vector<256x128xf32>
    %15 = arith.addf %12, %14 : vector<256x128xf32>
    %cst_8 = arith.constant 0.000000e+00 : f32
    %16 = vector.broadcast %cst_8 : f32 to vector<256x128xf32>
    %17 = arith.maximumf %15, %16 : vector<256x128xf32>
    %c0_9 = arith.constant 0 : index
    %c0_10 = arith.constant 0 : index
    %18 = vector.load %arg4[%c0_9, %c0_10] : memref<129x128xf32, #tpu.memory_space<vmem>>, vector<129x128xf32>
    %19 = vector.extract_strided_slice %18 {offsets = [0, 0], sizes = [128, 128], strides = [1, 1]} : vector<129x128xf32> to vector<128x128xf32>
    %cst_11 = arith.constant dense<0.000000e+00> : vector<256x128xf32>
    %20 = tpu.matmul %17, %19, %cst_11 {dimension_numbers = #tpu.dot_dimension_numbers<[1], [0], [0], [1], [0, 0, 1, 1], [], []>} : vector<256x128xf32>, vector<128x128xf32>, vector<256x128xf32> -> vector<256x128xf32>
    %21 = vector.extract_strided_slice %18 {offsets = [128, 0], sizes = [1, 128], strides = [1, 1]} : vector<129x128xf32> to vector<1x128xf32>
    %22 = vector.broadcast %21 : vector<1x128xf32> to vector<256x128xf32>
    %23 = arith.addf %20, %22 : vector<256x128xf32>
    %24 = vector.extract_strided_slice %23 {offsets = [0, 0], sizes = [256, 3], strides = [1, 1]} : vector<256x128xf32> to vector<256x3xf32>
    %25 = arith.negf %24 : vector<256x3xf32>
    %26 = math.exp %25 : vector<256x3xf32>
    %cst_12 = arith.constant 1.000000e+00 : f32
    %27 = vector.broadcast %cst_12 : f32 to vector<256x3xf32>
    %28 = arith.addf %27, %26 : vector<256x3xf32>
    %29 = arith.divf %27, %28 : vector<256x3xf32>
    %c0_13 = arith.constant 0 : index
    %c0_14 = arith.constant 0 : index
    %30 = vector.load %arg5[%c0_13, %c0_14] : memref<256x3xf32, #tpu.memory_space<vmem>>, vector<256x3xf32>
    tpu.vector_store %arg5[%c0_13, %c0_14], %29 {strides = array<i32>} : memref<256x3xf32, #tpu.memory_space<vmem>>, vector<256x3xf32>,
    return
  }
  func.func @transform_0(%arg0: i32) -> (i32, i32) {
    %c0_i32 = arith.constant 0 : i32
    %c0_i32_0 = arith.constant 0 : i32
    return %arg0, %c0_i32 : i32, i32
  }
  func.func @transform_1(%arg0: i32) -> (i32, i32) {
    %c0_i32 = arith.constant 0 : i32
    %c0_i32_0 = arith.constant 0 : i32
    %c0_i32_1 = arith.constant 0 : i32
    return %c0_i32, %c0_i32_0 : i32, i32
  }
  func.func @transform_2(%arg0: i32) -> (i32, i32, i32) {
    %c0_i32 = arith.constant 0 : i32
    %c0_i32_0 = arith.constant 0 : i32
    %c0_i32_1 = arith.constant 0 : i32
    %c0_i32_2 = arith.constant 0 : i32
    return %c0_i32, %c0_i32_0, %c0_i32_1 : i32, i32, i32
  }
  func.func @transform_3(%arg0: i32) -> (i32, i32) {
    %c0_i32 = arith.constant 0 : i32
    %c0_i32_0 = arith.constant 0 : i32
    %c0_i32_1 = arith.constant 0 : i32
    return %c0_i32, %c0_i32_0 : i32, i32
  }
  func.func @transform_4(%arg0: i32) -> (i32, i32) {
    %c0_i32 = arith.constant 0 : i32
    %c0_i32_0 = arith.constant 0 : i32
    return %arg0, %c0_i32 : i32, i32
  }
}

</mosaic_0001>

<llo_original>
// kernel: tpu_custom_call.1
$region0: #{tpu_custom_call.1}
  #allocation0 [shape = 'u32[]', space=smem, size = 0x4, offset = 0x4, fixed_abs, tag = 'smem constant byte address 0x4 - core index']
  #allocation1 [shape = 'u32[144,128]{1,0:T(1,128)}', space=vmem, size = 0x12000, scoped, tag = 'internal scratch']
  %s0 = inlined_call_operand.vmem [shape: f32[1024,41], index: 0, kind: input, shape index: {}]
  %s1 = inlined_call_operand.vmem [shape: f32[42,128], index: 1, kind: input, shape index: {}]
  %s2 = inlined_call_operand.vmem [shape: f32[1,129,128], index: 2, kind: input, shape index: {}]
  %s3 = inlined_call_operand.vmem [shape: f32[129,128], index: 3, kind: input, shape index: {}]
  %s4 = inlined_call_operand.vmem [shape: f32[1024,3], index: 4, kind: output, shape index: {}]
  %s5 = sld [smem:[#allocation0]]
  $region49: #{tpu_custom_call.1} parent=0
    _
  %s7 = ssub.s32 1, %s5
  %s8 = scalar_select 0, %s7, %s5
  loop: start=0, step=1, limit=6
  $region2: #{tpu_custom_call.1} parent=0 // loop_pre_header
    _
  $region3: #{tpu_custom_call.1} parent=0 // loop_header
    %s10 = sphi 0, %s14
    %p11 = scmp.ge.s32.totalorder %s10, 6
    %s20 = sphi 0, %s22
    %s23 = sphi 0, %s20
    %s24 = sphi 0, %s23
    %s40 = sphi 0, %s24
    %s44 = sphi 0, %s44
    %s46 = sphi 0, %s44
    %s47 = sphi 0, %s46
    %s61 = sphi 0, %s47
    %s65 = sphi 0, %s65
    %s67 = sphi 0, %s65
    %s68 = sphi 0, %s67
    %s82 = sphi 0, %s68
    %s86 = sphi 0, %s86
    %s88 = sphi 0, %s86
    %s89 = sphi 0, %s88
    %s103 = sphi 0, %s89
    %s109 = sphi 0, %s111
    %s112 = sphi 0, %s109
    %s113 = sphi 0, %s112
    %s129 = sphi 0, %s113
  $region4: #{tpu_custom_call.1} parent=0 // loop_header_branch
    %13 = sbr.rel (%p11) target = $region8
  $region5: #{tpu_custom_call.1} parent=0 // loop_body
    %s15 = ssub.s32 %s10, 1
    %s16 = ssub.s32 %s10, 2
    %s17 = sadd.s32 %s10, 1
    %s18 = ssub.s32 %s10, %s17
    %p19 = scmp.eq.s32.totalorder %s18, 0
    %s21 = sadd.s32 %s20, 1
    %s22 = scalar_select %p19, %s20, %s21
    %p25 = pneg %p19
    %p26 = scmp.eq.s32.totalorder %s10, 3
    %p27 = por %p25, %p26
    %p28 = scmp.ne.s32.totalorder %s20, %s23
    %p29 = scmp.eq.s32.totalorder %s10, 0
    %p30 = por %p28, %p29
    %p31 = scmp.ne.s32.totalorder %s20, %s23
    %p32 = scmp.eq.s32.totalorder %s15, 3
    %p33 = por %p31, %p32
    %p34 = scmp.ne.s32.totalorder %s23, %s24
    %p35 = scmp.eq.s32.totalorder %s15, 0
    %p36 = por %p34, %p35
    %p37 = scmp.ne.s32.totalorder %s23, %s24
    %p38 = scmp.eq.s32.totalorder %s16, 3
    %p39 = por %p37, %p38
    %p41 = scmp.ne.s32.totalorder %s24, %s40
    %p42 = scmp.eq.s32.totalorder %s16, 0
    %p43 = por %p41, %p42
    %s45 = sadd.s32 %s44, 1
    %p48 = scmp.eq.s32.totalorder %s10, 3
    %p49 = scmp.ne.s32.totalorder %s44, %s46
    %p50 = scmp.eq.s32.totalorder %s10, 0
    %p51 = por %p49, %p50
    %p52 = scmp.ne.s32.totalorder %s44, %s46
    %p53 = scmp.eq.s32.totalorder %s15, 3
    %p54 = por %p52, %p53
    %p55 = scmp.ne.s32.totalorder %s46, %s47
    %p56 = scmp.eq.s32.totalorder %s15, 0
    %p57 = por %p55, %p56
    %p58 = scmp.ne.s32.totalorder %s46, %s47
    %p59 = scmp.eq.s32.totalorder %s16, 3
    %p60 = por %p58, %p59
    %p62 = scmp.ne.s32.totalorder %s47, %s61
    %p63 = scmp.eq.s32.totalorder %s16, 0
    %p64 = por %p62, %p63
    %s66 = sadd.s32 %s65, 1
    %p69 = scmp.eq.s32.totalorder %s10, 3
    %p70 = scmp.ne.s32.totalorder %s65, %s67
    %p71 = scmp.eq.s32.totalorder %s10, 0
    %p72 = por %p70, %p71
    %p73 = scmp.ne.s32.totalorder %s65, %s67
    %p74 = scmp.eq.s32.totalorder %s15, 3
    %p75 = por %p73, %p74
    %p76 = scmp.ne.s32.totalorder %s67, %s68
    %p77 = scmp.eq.s32.totalorder %s15, 0
    %p78 = por %p76, %p77
    %p79 = scmp.ne.s32.totalorder %s67, %s68
    %p80 = scmp.eq.s32.totalorder %s16, 3
    %p81 = por %p79, %p80
    %p83 = scmp.ne.s32.totalorder %s68, %s82
    %p84 = scmp.eq.s32.totalorder %s16, 0
    %p85 = por %p83, %p84
    %s87 = sadd.s32 %s86, 1
    %p90 = scmp.eq.s32.totalorder %s10, 3
    %p91 = scmp.ne.s32.totalorder %s86, %s88
    %p92 = scmp.eq.s32.totalorder %s10, 0
    %p93 = por %p91, %p92
    %p94 = scmp.ne.s32.totalorder %s86, %s88
    %p95 = scmp.eq.s32.totalorder %s15, 3
    %p96 = por %p94, %p95
    %p97 = scmp.ne.s32.totalorder %s88, %s89
    %p98 = scmp.eq.s32.totalorder %s15, 0
    %p99 = por %p97, %p98
    %p100 = scmp.ne.s32.totalorder %s88, %s89
    %p101 = scmp.eq.s32.totalorder %s16, 3
    %p102 = por %p100, %p101
    %p104 = scmp.ne.s32.totalorder %s89, %s103
    %p105 = scmp.eq.s32.totalorder %s16, 0
    %p106 = por %p104, %p105
    %s107 = ssub.s32 %s10, %s17
    %p108 = scmp.eq.s32.totalorder %s107, 0
    %s110 = sadd.s32 %s109, 1
    %s111 = scalar_select %p108, %s109, %s110
    %p114 = pneg %p108
    %p115 = scmp.eq.s32.totalorder %s10, 3
    %p116 = por %p114, %p115
    %p117 = scmp.ne.s32.totalorder %s109, %s112
    %p118 = scmp.eq.s32.totalorder %s10, 0
    %p119 = por %p117, %p118
    %p120 = scmp.ne.s32.totalorder %s109, %s112
    %p121 = scmp.eq.s32.totalorder %s15, 3
    %p122 = por %p120, %p121
    %p123 = scmp.ne.s32.totalorder %s112, %s113
    %p124 = scmp.eq.s32.totalorder %s15, 0
    %p125 = por %p123, %p124
    %p126 = scmp.ne.s32.totalorder %s112, %s113
    %p127 = scmp.eq.s32.totalorder %s16, 3
    %p128 = por %p126, %p127
    %p130 = scmp.ne.s32.totalorder %s113, %s129
    %p131 = scmp.eq.s32.totalorder %s16, 0
    %p132 = por %p130, %p131
    %p133 = scmp.le.s32.totalorder 1, %s10
    %p134 = scmp.lt.s32.totalorder %s10, 5
    %p135 = pnand %p133, %p134
    %p136 = pneg %p135
    // Predicated region
    $region9: #{tpu_custom_call.1} parent=5 // pred_check
      _
    $region10: #{tpu_custom_call.1} parent=5 // pred_check_branch
      %138 = sbr.rel (%p135) target = $region12
    $region11: #{tpu_custom_call.1} parent=5 // pred_region
      %s139 = ssub.s32 %s10, 1
      // Predicated region
      $region13: #{tpu_custom_call.1} parent=11 // pred_check
        %p140 = pneg %p57
      $region14: #{tpu_custom_call.1} parent=11 // pred_check_branch
        %142 = sbr.rel (%p140) target = $region16
      $region15: #{tpu_custom_call.1} parent=11 // pred_region
        _
      $region16: #{tpu_custom_call.1} parent=11 // pred_fallthru
        _
      // Predicated region
      $region17: #{tpu_custom_call.1} parent=11 // pred_check
        %p143 = pneg %p78
      $region18: #{tpu_custom_call.1} parent=11 // pred_check_branch
        %145 = sbr.rel (%p143) target = $region20
      $region19: #{tpu_custom_call.1} parent=11 // pred_region
        _
      $region20: #{tpu_custom_call.1} parent=11 // pred_fallthru
        _
      // Predicated region
      $region21: #{tpu_custom_call.1} parent=11 // pred_check
        %p146 = pneg %p99
      $region22: #{tpu_custom_call.1} parent=11 // pred_check_branch
        %148 = sbr.rel (%p146) target = $region24
      $region23: #{tpu_custom_call.1} parent=11 // pred_region
        _
      $region24: #{tpu_custom_call.1} parent=11 // pred_fallthru
        _
    $region12: #{tpu_custom_call.1} parent=5 // pred_fallthru
      _
    %p149 = scmp.lt.s32.totalorder %s10, 4
    // Predicated region
    $region25: #{tpu_custom_call.1} parent=5 // pred_check
      %p150 = pneg %p149
    $region26: #{tpu_custom_call.1} parent=5 // pred_check_branch
      %152 = sbr.rel (%p150) target = $region28
    $region27: #{tpu_custom_call.1} parent=5 // pred_region
      // Predicated region
      $region29: #{tpu_custom_call.1} parent=27 // pred_check
        %p153 = pneg %p30
      $region30: #{tpu_custom_call.1} parent=27 // pred_check_branch
        %155 = sbr.rel (%p153) target = $region32
      $region31: #{tpu_custom_call.1} parent=27 // pred_region
        %s156 = smul.u32 32, %s10
        %p157 = scmp.lt.s32.totalorder %s156, 127
        %s158 = scalar_select %p157, %s156, 127
        %s159 = smul.addr %s158, 8
        %s160 = scalar_lea.vmem %s0, %s159
        %s161 = smul.u32 32, %s10
      $region32: #{tpu_custom_call.1} parent=27 // pred_fallthru
        _
    $region28: #{tpu_custom_call.1} parent=5 // pred_fallthru
      _
    %p162 = scmp.le.s32.totalorder 1, %s10
    %p163 = scmp.lt.s32.totalorder %s10, 5
    %p164 = pnand %p162, %p163
    %p165 = pneg %p164
    // Predicated region
    $region33: #{tpu_custom_call.1} parent=5 // pred_check
      _
    $region34: #{tpu_custom_call.1} parent=5 // pred_check_branch
      %167 = sbr.rel (%p164) target = $region36
    $region35: #{tpu_custom_call.1} parent=5 // pred_region
      %s168 = ssub.s32 %s10, 1
      %s169 = smul.u32 32, %s15
      %p170 = scmp.lt.s32.totalorder %s169, 127
      %s171 = scalar_select %p170, %s169, 127
      %s172 = smul.addr %s171, 8
      %s173 = scalar_lea.vmem %s0, %s172
      %p174 = pneg %p36
      %p175 = pneg %p33
      %p176 = pneg %p57
      %p177 = pneg %p54
      %p178 = pneg %p78
      %p179 = pneg %p75
      %p180 = pneg %p99
      %p181 = pneg %p96
      %p182 = pneg %p125
      %p183 = pneg %p122
      %s184 = smul.u32 32, %s15
      %p185 = scmp.lt.s32.totalorder %s184, 127
      %s186 = scalar_select %p185, %s184, 127
      %s187 = smul.addr %s186, 8
      %s188 = scalar_lea.vmem %s4, %s187
      %s189 = smul.u32 32, %s15
      %p190 = scmp.lt.s32.totalorder %s189, 127
      %s191 = scalar_select %p190, %s189, 127
      %s192 = smul.addr %s191, 8
      %s193 = scalar_lea.vmem %s0, %s192
      %s194 = smul.u32 32, %s15
      %s195 = smul.u32 32, %s15
      %p196 = scmp.lt.s32.totalorder %s195, 127
      %s197 = scalar_select %p196, %s195, 127
      %s198 = smul.addr %s197, 8
      %s199 = scalar_lea.vmem %s4, %s198
      %s200 = smul.u32 32, %s15
      %v201 = vld [vmem:[%s1] sm:$0xff]
      %v202 = vld [vmem:[%s1 + $0x8] sm:$0xff]
      %v203 = vld [vmem:[%s1 + $0x10] sm:$0xff]
      %v204 = vld [vmem:[%s1 + $0x18] sm:$0xff]
      %v205 = vld [vmem:[%s1 + $0x20] sm:$0xff]
      %v206 = vld [vmem:[%s1 + $0x28] sm:$0x3]
      %v207 = vld [vmem:[%s193] sm:$0xff]
      %v208 = vld [vmem:[%s193 + $0x8] sm:$0xff]
      %v209 = vld [vmem:[%s193 + $0x10] sm:$0xff]
      %v210 = vld [vmem:[%s193 + $0x18] sm:$0xff]
      %v211 = vld [vmem:[%s193 + $0x20] sm:$0xff]
      %v212 = vld [vmem:[%s193 + $0x28] sm:$0xff]
      %v213 = vld [vmem:[%s193 + $0x30] sm:$0xff]
      %v214 = vld [vmem:[%s193 + $0x38] sm:$0xff]
      %v215 = vld [vmem:[%s193 + $0x40] sm:$0xff]
      %v216 = vld [vmem:[%s193 + $0x48] sm:$0xff]
      %v217 = vld [vmem:[%s193 + $0x50] sm:$0xff]
      %v218 = vld [vmem:[%s193 + $0x58] sm:$0xff]
      %v219 = vld [vmem:[%s193 + $0x60] sm:$0xff]
      %v220 = vld [vmem:[%s193 + $0x68] sm:$0xff]
      %v221 = vld [vmem:[%s193 + $0x70] sm:$0xff]
      %v222 = vld [vmem:[%s193 + $0x78] sm:$0xff]
      %v223 = vld [vmem:[%s193 + $0x80] sm:$0xff]
      %v224 = vld [vmem:[%s193 + $0x88] sm:$0xff]
      %v225 = vld [vmem:[%s193 + $0x90] sm:$0xff]
      %v226 = vld [vmem:[%s193 + $0x98] sm:$0xff]
      %v227 = vld [vmem:[%s193 + $0xa0] sm:$0xff]
      %v228 = vld [vmem:[%s193 + $0xa8] sm:$0xff]
      %v229 = vld [vmem:[%s193 + $0xb0] sm:$0xff]
      %v230 = vld [vmem:[%s193 + $0xb8] sm:$0xff]
      %v231 = vld [vmem:[%s193 + $0xc0] sm:$0xff]
      %v232 = vld [vmem:[%s193 + $0xc8] sm:$0xff]
      %v233 = vld [vmem:[%s193 + $0xd0] sm:$0xff]
      %v234 = vld [vmem:[%s193 + $0xd8] sm:$0xff]
      %v235 = vld [vmem:[%s193 + $0xe0] sm:$0xff]
      %v236 = vld [vmem:[%s193 + $0xe8] sm:$0xff]
      %v237 = vld [vmem:[%s193 + $0xf0] sm:$0xff]
      %v238 = vld [vmem:[%s193 + $0xf8] sm:$0xff]
      %v239 = vlaneseq
      %v240 = vshrl.u32 %v239, 7
      %v241 = vsub.s32 1, %v240
      %v242 = vrot.slane %v206, %v241
      %vm243 = vcmask 334848
      %v245 = vsel %vm243, %v207, 0
      %v248 = vsel %vm243, %v208, 0
      %v251 = vsel %vm243, %v209, 0
      %v254 = vsel %vm243, %v210, 0
      %v257 = vsel %vm243, %v211, 0
      %v260 = vsel %vm243, %v212, 0
      %v263 = vsel %vm243, %v213, 0
      %v266 = vsel %vm243, %v214, 0
      %v269 = vsel %vm243, %v215, 0
      %v272 = vsel %vm243, %v216, 0
      %v275 = vsel %vm243, %v217, 0
      %v278 = vsel %vm243, %v218, 0
      %v281 = vsel %vm243, %v219, 0
      %v284 = vsel %vm243, %v220, 0
      %v287 = vsel %vm243, %v221, 0
      %v290 = vsel %vm243, %v222, 0
      %v293 = vsel %vm243, %v223, 0
      %v296 = vsel %vm243, %v224, 0
      %v299 = vsel %vm243, %v225, 0
      %v302 = vsel %vm243, %v226, 0
      %v305 = vsel %vm243, %v227, 0
      %v308 = vsel %vm243, %v228, 0
      %v311 = vsel %vm243, %v229, 0
      %v314 = vsel %vm243, %v230, 0
      %v317 = vsel %vm243, %v231, 0
      %v320 = vsel %vm243, %v232, 0
      %v323 = vsel %vm243, %v233, 0
      %v326 = vsel %vm243, %v234, 0
      %v329 = vsel %vm243, %v235, 0
      %v332 = vsel %vm243, %v236, 0
      %v335 = vsel %vm243, %v237, 0
      %v338 = vsel %vm243, %v238, 0
      %vm340 = vcmask 1040384
      %v342 = vsel %vm340, %v206, 0
      %344 = vmatprep.subr.mxu0 0.0
      %345 = vmatpush1.msra.mxu0 %v201
      %346 = vmatprep.subr.mxu0 0.0
      %347 = vmatpush1.msra.mxu0 %v202
      %348 = vmatprep.subr.mxu0 0.0
      %349 = vmatpush1.msra.mxu0 %v203
      %350 = vmatprep.subr.mxu0 0.0
      %351 = vmatpush1.msra.mxu0 %v204
      %352 = vmatprep.subr.mxu0 0.0
      %353 = vmatpush1.msra.mxu0 %v205
      %354 = vmatprep.subr.mxu0 0.0
      %355 = vmatpush1.msra.mxu0 %v342
      %356 = vmatprep.subr.mxu0 0.0
      %357 = vmatpush1.msra.mxu0 0.0
      %358 = vmatprep.subr.mxu0 0.0
      %359 = vmatpush1.msra.mxu0 0.0
      %360 = vmatprep.subr.mxu0 0.0
      %361 = vmatpush1.msra.mxu0 0.0
      %362 = vmatprep.subr.mxu0 0.0
      %363 = vmatpush1.msra.mxu0 0.0
      %364 = vmatprep.subr.mxu0 0.0
      %365 = vmatpush1.msra.mxu0 0.0
      %366 = vmatprep.subr.mxu0 0.0
      %367 = vmatpush1.msra.mxu0 0.0
      %368 = vmatprep.subr.mxu0 0.0
      %369 = vmatpush1.msra.mxu0 0.0
      %370 = vmatprep.subr.mxu0 0.0
      %371 = vmatpush1.msra.mxu0 0.0
      %372 = vmatprep.subr.mxu0 0.0
      %373 = vmatpush1.msra.mxu0 0.0
      %374 = vmatprep.subr.mxu0 0.0
      %375 = vmatpush1.msra.mxu0 0.0
      %376 = vmatprep.subr.mxu0 0.0
      %377 = vmatpush1.msra.mxu0 0.0
      %378 = vmatprep.subr.mxu0 0.0
      %379 = vmatpush1.msra.mxu0 0.0
      %380 = vmatprep.subr.mxu0 0.0
      %381 = vmatpush1.msra.mxu0 0.0
      %382 = vmatprep.subr.mxu0 0.0
      %383 = vmatpush1.msra.mxu0 0.0
      %384 = vmatprep.subr.mxu0 0.0
      %385 = vmatpush1.msra.mxu0 0.0
      %386 = vmatprep.subr.mxu0 0.0
      %387 = vmatpush1.msra.mxu0 0.0
      %388 = vmatprep.subr.mxu0 0.0
      %389 = vmatpush1.msra.mxu0 0.0
      %390 = vmatprep.subr.mxu0 0.0
      %391 = vmatpush1.msra.mxu0 0.0
      %392 = vmatprep.subr.mxu0 0.0
      %393 = vmatpush1.msra.mxu0 0.0
      %394 = vmatprep.subr.mxu0 0.0
      %395 = vmatpush1.msra.mxu0 0.0
      %396 = vmatprep.subr.mxu0 0.0
      %397 = vmatpush1.msra.mxu0 0.0
      %398 = vmatprep.subr.mxu0 0.0
      %399 = vmatpush1.msra.mxu0 0.0
      %400 = vmatprep.subr.mxu0 0.0
      %401 = vmatpush1.msra.mxu0 0.0
      %402 = vmatprep.subr.mxu0 0.0
      %403 = vmatpush1.msra.mxu0 0.0
      %404 = vmatprep.subr.mxu0 0.0
      %405 = vmatpush1.msra.mxu0 0.0
      %406 = vmatprep.subr.mxu0 0.0
      %407 = vmatpush1.msra.mxu0 0.0
      %408 = vmatprep.mubr.f32.mxu0 0.0
      %409 = vmatmul.mubr.f32.gmra.mrb[0].mxu0 %v245
      %v410 = vpop.f32.mrb[0].mxu0
      %v411 = vadd.f32 %v242, %v410
      %v412 = vpop.f32.mrb[0].mxu0
      %413 = vmatprep.mubr.f32.mxu0 0.0
      %414 = vmatmul.mubr.f32.gmra.mrb[0].mxu0 %v248
      %v415 = vpop.f32.mrb[0].mxu0
      %v416 = vadd.f32 %v242, %v415
      %v417 = vpop.f32.mrb[0].mxu0
      %418 = vmatprep.mubr.f32.mxu0 0.0
      %419 = vmatmul.mubr.f32.gmra.mrb[0].mxu0 %v251
      %v420 = vpop.f32.mrb[0].mxu0
      %v421 = vadd.f32 %v242, %v420
      %v422 = vpop.f32.mrb[0].mxu0
      %423 = vmatprep.mubr.f32.mxu0 0.0
      %424 = vmatmul.mubr.f32.gmra.mrb[0].mxu0 %v254
      %v425 = vpop.f32.mrb[0].mxu0
      %v426 = vadd.f32 %v242, %v425
      %v427 = vpop.f32.mrb[0].mxu0
      %428 = vmatprep.mubr.f32.mxu0 0.0
      %429 = vmatmul.mubr.f32.gmra.mrb[0].mxu0 %v257
      %v430 = vpop.f32.mrb[0].mxu0
      %v431 = vadd.f32 %v242, %v430
      %v432 = vpop.f32.mrb[0].mxu0
      %433 = vmatprep.mubr.f32.mxu0 0.0
      %434 = vmatmul.mubr.f32.gmra.mrb[0].mxu0 %v260
      %v435 = vpop.f32.mrb[0].mxu0
      %v436 = vadd.f32 %v242, %v435
      %v437 = vpop.f32.mrb[0].mxu0
      %438 = vmatprep.mubr.f32.mxu0 0.0
      %439 = vmatmul.mubr.f32.gmra.mrb[0].mxu0 %v263
      %v440 = vpop.f32.mrb[0].mxu0
      %v441 = vadd.f32 %v242, %v440
      %v442 = vpop.f32.mrb[0].mxu0
      %443 = vmatprep.mubr.f32.mxu0 0.0
      %444 = vmatmul.mubr.f32.gmra.mrb[0].mxu0 %v266
      %v445 = vpop.f32.mrb[0].mxu0
      %v446 = vadd.f32 %v242, %v445
      %v447 = vpop.f32.mrb[0].mxu0
      %448 = vmatprep.mubr.f32.mxu0 0.0
      %449 = vmatmul.mubr.f32.gmra.mrb[0].mxu0 %v269
      %v450 = vpop.f32.mrb[0].mxu0
      %v451 = vadd.f32 %v242, %v450
      %v452 = vpop.f32.mrb[0].mxu0
      %453 = vmatprep.mubr.f32.mxu0 0.0
      %454 = vmatmul.mubr.f32.gmra.mrb[0].mxu0 %v272
      %v455 = vpop.f32.mrb[0].mxu0
      %v456 = vadd.f32 %v242, %v455
      %v457 = vpop.f32.mrb[0].mxu0
      %458 = vmatprep.mubr.f32.mxu0 0.0
      %459 = vmatmul.mubr.f32.gmra.mrb[0].mxu0 %v275
      %v460 = vpop.f32.mrb[0].mxu0
      %v461 = vadd.f32 %v242, %v460
      %v462 = vpop.f32.mrb[0].mxu0
      %463 = vmatprep.mubr.f32.mxu0 0.0
      %464 = vmatmul.mubr.f32.gmra.mrb[0].mxu0 %v278
      %v465 = vpop.f32.mrb[0].mxu0
      %v466 = vadd.f32 %v242, %v465
      %v467 = vpop.f32.mrb[0].mxu0
      %468 = vmatprep.mubr.f32.mxu0 0.0
      %469 = vmatmul.mubr.f32.gmra.mrb[0].mxu0 %v281
      %v470 = vpop.f32.mrb[0].mxu0
      %v471 = vadd.f32 %v242, %v470
      %v472 = vpop.f32.mrb[0].mxu0
      %473 = vmatprep.mubr.f32.mxu0 0.0
      %474 = vmatmul.mubr.f32.gmra.mrb[0].mxu0 %v284
      %v475 = vpop.f32.mrb[0].mxu0
      %v476 = vadd.f32 %v242, %v475
      %v477 = vpop.f32.mrb[0].mxu0
      %478 = vmatprep.mubr.f32.mxu0 0.0
      %479 = vmatmul.mubr.f32.gmra.mrb[0].mxu0 %v287
      %v480 = vpop.f32.mrb[0].mxu0
      %v481 = vadd.f32 %v242, %v480
      %v482 = vpop.f32.mrb[0].mxu0
      %483 = vmatprep.mubr.f32.mxu0 0.0
      %484 = vmatmul.mubr.f32.gmra.mrb[0].mxu0 %v290
      %v485 = vpop.f32.mrb[0].mxu0
      %v486 = vadd.f32 %v242, %v485
      %v487 = vpop.f32.mrb[0].mxu0
      %488 = vmatprep.mubr.f32.mxu0 0.0
      %489 = vmatmul.mubr.f32.gmra.mrb[0].mxu0 %v293
      %v490 = vpop.f32.mrb[0].mxu0
      %v491 = vadd.f32 %v242, %v490
      %v492 = vpop.f32.mrb[0].mxu0
      %493 = vmatprep.mubr.f32.mxu0 0.0
      %494 = vmatmul.mubr.f32.gmra.mrb[0].mxu0 %v296
      %v495 = vpop.f32.mrb[0].mxu0
      %v496 = vadd.f32 %v242, %v495
      %v497 = vpop.f32.mrb[0].mxu0
      %498 = vmatprep.mubr.f32.mxu0 0.0
      %499 = vmatmul.mubr.f32.gmra.mrb[0].mxu0 %v299
      %v500 = vpop.f32.mrb[0].mxu0
      %v501 = vadd.f32 %v242, %v500
      %v502 = vpop.f32.mrb[0].mxu0
      %503 = vmatprep.mubr.f32.mxu0 0.0
      %504 = vmatmul.mubr.f32.gmra.mrb[0].mxu0 %v302
      %v505 = vpop.f32.mrb[0].mxu0
      %v506 = vadd.f32 %v242, %v505
      %v507 = vpop.f32.mrb[0].mxu0
      %508 = vmatprep.mubr.f32.mxu0 0.0
      %509 = vmatmul.mubr.f32.gmra.mrb[0].mxu0 %v305
      %v510 = vpop.f32.mrb[0].mxu0
      %v511 = vadd.f32 %v242, %v510
      %v512 = vpop.f32.mrb[0].mxu0
      %513 = vmatprep.mubr.f32.mxu0 0.0
      %514 = vmatmul.mubr.f32.gmra.mrb[0].mxu0 %v308
      %v515 = vpop.f32.mrb[0].mxu0
      %v516 = vadd.f32 %v242, %v515
      %v517 = vpop.f32.mrb[0].mxu0
      %518 = vmatprep.mubr.f32.mxu0 0.0
      %519 = vmatmul.mubr.f32.gmra.mrb[0].mxu0 %v311
      %v520 = vpop.f32.mrb[0].mxu0
      %v521 = vadd.f32 %v242, %v520
      %v522 = vpop.f32.mrb[0].mxu0
      %523 = vmatprep.mubr.f32.mxu0 0.0
      %524 = vmatmul.mubr.f32.gmra.mrb[0].mxu0 %v314
      %v525 = vpop.f32.mrb[0].mxu0
      %v526 = vadd.f32 %v242, %v525
      %v527 = vpop.f32.mrb[0].mxu0
      %528 = vmatprep.mubr.f32.mxu0 0.0
      %529 = vmatmul.mubr.f32.gmra.mrb[0].mxu0 %v317
      %v530 = vpop.f32.mrb[0].mxu0
      %v531 = vadd.f32 %v242, %v530
      %v532 = vpop.f32.mrb[0].mxu0
      %533 = vmatprep.mubr.f32.mxu0 0.0
      %534 = vmatmul.mubr.f32.gmra.mrb[0].mxu0 %v320
      %v535 = vpop.f32.mrb[0].mxu0
      %v536 = vadd.f32 %v242, %v535
      %v537 = vpop.f32.mrb[0].mxu0
      %538 = vmatprep.mubr.f32.mxu0 0.0
      %539 = vmatmul.mubr.f32.gmra.mrb[0].mxu0 %v323
      %v540 = vpop.f32.mrb[0].mxu0
      %v541 = vadd.f32 %v242, %v540
      %v542 = vpop.f32.mrb[0].mxu0
      %543 = vmatprep.mubr.f32.mxu0 0.0
      %544 = vmatmul.mubr.f32.gmra.mrb[0].mxu0 %v326
      %v545 = vpop.f32.mrb[0].mxu0
      %v546 = vadd.f32 %v242, %v545
      %v547 = vpop.f32.mrb[0].mxu0
      %548 = vmatprep.mubr.f32.mxu0 0.0
      %549 = vmatmul.mubr.f32.gmra.mrb[0].mxu0 %v329
      %v550 = vpop.f32.mrb[0].mxu0
      %v551 = vadd.f32 %v242, %v550
      %v552 = vpop.f32.mrb[0].mxu0
      %553 = vmatprep.mubr.f32.mxu0 0.0
      %554 = vmatmul.mubr.f32.gmra.mrb[0].mxu0 %v332
      %v555 = vpop.f32.mrb[0].mxu0
      %v556 = vadd.f32 %v242, %v555
      %v557 = vpop.f32.mrb[0].mxu0
      %558 = vmatprep.mubr.f32.mxu0 0.0
      %559 = vmatmul.mubr.f32.gmra.mrb[0].mxu0 %v335
      %v560 = vpop.f32.mrb[0].mxu0
      %v561 = vadd.f32 %v242, %v560
      %v562 = vpop.f32.mrb[0].mxu0
      %563 = vmatprep.mubr.f32.mxu0 0.0
      %564 = vmatmul.mubr.f32.gmra.mrb[0].mxu0 %v338
      %v565 = vpop.f32.mrb[0].mxu0
      %v566 = vadd.f32 %v242, %v565
      %v567 = vpop.f32.mrb[0].mxu0
      %568 = vdwg.mxu0
      %v569 = vmax.f32 %v411, 0.0
      %v570 = vmax.f32 %v416, 0.0
      %v571 = vmax.f32 %v421, 0.0
      %v572 = vmax.f32 %v426, 0.0
      %v573 = vmax.f32 %v431, 0.0
      %v574 = vmax.f32 %v436, 0.0
      %v575 = vmax.f32 %v441, 0.0
      %v576 = vmax.f32 %v446, 0.0
      %v577 = vmax.f32 %v451, 0.0
      %v578 = vmax.f32 %v456, 0.0
      %v579 = vmax.f32 %v461, 0.0
      %v580 = vmax.f32 %v466, 0.0
      %v581 = vmax.f32 %v471, 0.0
      %v582 = vmax.f32 %v476, 0.0
      %v583 = vmax.f32 %v481, 0.0
      %v584 = vmax.f32 %v486, 0.0
      %v585 = vmax.f32 %v491, 0.0
      %v586 = vmax.f32 %v496, 0.0
      %v587 = vmax.f32 %v501, 0.0
      %v588 = vmax.f32 %v506, 0.0
      %v589 = vmax.f32 %v511, 0.0
      %v590 = vmax.f32 %v516, 0.0
      %v591 = vmax.f32 %v521, 0.0
      %v592 = vmax.f32 %v526, 0.0
      %v593 = vmax.f32 %v531, 0.0
      %v594 = vmax.f32 %v536, 0.0
      %v595 = vmax.f32 %v541, 0.0
      %v596 = vmax.f32 %v546, 0.0
      %v597 = vmax.f32 %v551, 0.0
      %v598 = vmax.f32 %v556, 0.0
      %v599 = vmax.f32 %v561, 0.0
      %v600 = vmax.f32 %v566, 0.0
      %v601 = vld [vmem:[%s2] sm:$0xff]
      %v602 = vld [vmem:[%s2 + $0x8] sm:$0xff]
      %v603 = vld [vmem:[%s2 + $0x10] sm:$0xff]
      %v604 = vld [vmem:[%s2 + $0x18] sm:$0xff]
      %v605 = vld [vmem:[%s2 + $0x20] sm:$0xff]
      %v606 = vld [vmem:[%s2 + $0x28] sm:$0xff]
      %v607 = vld [vmem:[%s2 + $0x30] sm:$0xff]
      %v608 = vld [vmem:[%s2 + $0x38] sm:$0xff]
      %v609 = vld [vmem:[%s2 + $0x40] sm:$0xff]
      %v610 = vld [vmem:[%s2 + $0x48] sm:$0xff]
      %v611 = vld [vmem:[%s2 + $0x50] sm:$0xff]
      %v612 = vld [vmem:[%s2 + $0x58] sm:$0xff]
      %v613 = vld [vmem:[%s2 + $0x60] sm:$0xff]
      %v614 = vld [vmem:[%s2 + $0x68] sm:$0xff]
      %v615 = vld [vmem:[%s2 + $0x70] sm:$0xff]
      %v616 = vld [vmem:[%s2 + $0x78] sm:$0xff]
      %v617 = vld [vmem:[%s2 + $0x80] sm:$0x1]
      %v618 = vlaneseq
      %v619 = vshrl.u32 %v618, 7
      %v620 = vsub.s32 0, %v619
      %v621 = vrot.slane %v617, %v620
      %622 = vmatprep.subr.mxu0 0.0
      %623 = vmatpush1.msra.mxu0 %v601
      %624 = vmatprep.subr.mxu0 0.0
      %625 = vmatpush1.msra.mxu0 %v602
      %626 = vmatprep.subr.mxu0 0.0
      %627 = vmatpush1.msra.mxu0 %v603
      %628 = vmatprep.subr.mxu0 0.0
      %629 = vmatpush1.msra.mxu0 %v604
      %630 = vmatprep.subr.mxu0 0.0
      %631 = vmatpush1.msra.mxu0 %v605
      %632 = vmatprep.subr.mxu0 0.0
      %633 = vmatpush1.msra.mxu0 %v606
      %634 = vmatprep.subr.mxu0 0.0
      %635 = vmatpush1.msra.mxu0 %v607
      %636 = vmatprep.subr.mxu0 0.0
      %637 = vmatpush1.msra.mxu0 %v608
      %638 = vmatprep.subr.mxu0 0.0
      %639 = vmatpush1.msra.mxu0 %v609
      %640 = vmatprep.subr.mxu0 0.0
      %641 = vmatpush1.msra.mxu0 %v610
      %642 = vmatprep.subr.mxu0 0.0
      %643 = vmatpush1.msra.mxu0 %v611
      %644 = vmatprep.subr.mxu0 0.0
      %645 = vmatpush1.msra.mxu0 %v612
      %646 = vmatprep.subr.mxu0 0.0
      %647 = vmatpush1.msra.mxu0 %v613
      %648 = vmatprep.subr.mxu0 0.0
      %649 = vmatpush1.msra.mxu0 %v614
      %650 = vmatprep.subr.mxu0 0.0
      %651 = vmatpush1.msra.mxu0 %v615
      %652 = vmatprep.subr.mxu0 0.0
      %653 = vmatpush1.msra.mxu0 %v616
      %654 = vmatprep.subr.mxu0 0.0
      %655 = vmatpush1.msra.mxu0 0.0
      %656 = vmatprep.subr.mxu0 0.0
      %657 = vmatpush1.msra.mxu0 0.0
      %658 = vmatprep.subr.mxu0 0.0
      %659 = vmatpush1.msra.mxu0 0.0
      %660 = vmatprep.subr.mxu0 0.0
      %661 = vmatpush1.msra.mxu0 0.0
      %662 = vmatprep.subr.mxu0 0.0
      %663 = vmatpush1.msra.mxu0 0.0
      %664 = vmatprep.subr.mxu0 0.0
      %665 = vmatpush1.msra.mxu0 0.0
      %666 = vmatprep.subr.mxu0 0.0
      %667 = vmatpush1.msra.mxu0 0.0
      %668 = vmatprep.subr.mxu0 0.0
      %669 = vmatpush1.msra.mxu0 0.0
      %670 = vmatprep.subr.mxu0 0.0
      %671 = vmatpush1.msra.mxu0 0.0
      %672 = vmatprep.subr.mxu0 0.0
      %673 = vmatpush1.msra.mxu0 0.0
      %674 = vmatprep.subr.mxu0 0.0
      %675 = vmatpush1.msra.mxu0 0.0
      %676 = vmatprep.subr.mxu0 0.0
      %677 = vmatpush1.msra.mxu0 0.0
      %678 = vmatprep.subr.mxu0 0.0
      %679 = vmatpush1.msra.mxu0 0.0
      %680 = vmatprep.subr.mxu0 0.0
      %681 = vmatpush1.msra.mxu0 0.0
      %682 = vmatprep.subr.mxu0 0.0
      %683 = vmatpush1.msra.mxu0 0.0
      %684 = vmatprep.subr.mxu0 0.0
      %685 = vmatpush1.msra.mxu0 0.0
      %686 = vmatprep.mubr.f32.mxu0 0.0
      %687 = vmatmul.mubr.f32.gmra.mrb[0].mxu0 %v569
      %v688 = vpop.f32.mrb[0].mxu0
      %v689 = vadd.f32 %v621, %v688
      %v690 = vpop.f32.mrb[0].mxu0
      %691 = vmatprep.mubr.f32.mxu0 0.0
      %692 = vmatmul.mubr.f32.gmra.mrb[0].mxu0 %v570
      %v693 = vpop.f32.mrb[0].mxu0
      %v694 = vadd.f32 %v621, %v693
      %v695 = vpop.f32.mrb[0].mxu0
      %696 = vmatprep.mubr.f32.mxu0 0.0
      %697 = vmatmul.mubr.f32.gmra.mrb[0].mxu0 %v571
      %v698 = vpop.f32.mrb[0].mxu0
      %v699 = vadd.f32 %v621, %v698
      %v700 = vpop.f32.mrb[0].mxu0
      %701 = vmatprep.mubr.f32.mxu0 0.0
      %702 = vmatmul.mubr.f32.gmra.mrb[0].mxu0 %v572
      %v703 = vpop.f32.mrb[0].mxu0
      %v704 = vadd.f32 %v621, %v703
      %v705 = vpop.f32.mrb[0].mxu0
      %706 = vmatprep.mubr.f32.mxu0 0.0
      %707 = vmatmul.mubr.f32.gmra.mrb[0].mxu0 %v573
      %v708 = vpop.f32.mrb[0].mxu0
      %v709 = vadd.f32 %v621, %v708
      %v710 = vpop.f32.mrb[0].mxu0
      %711 = vmatprep.mubr.f32.mxu0 0.0
      %712 = vmatmul.mubr.f32.gmra.mrb[0].mxu0 %v574
      %v713 = vpop.f32.mrb[0].mxu0
      %v714 = vadd.f32 %v621, %v713
      %v715 = vpop.f32.mrb[0].mxu0
      %716 = vmatprep.mubr.f32.mxu0 0.0
      %717 = vmatmul.mubr.f32.gmra.mrb[0].mxu0 %v575
      %v718 = vpop.f32.mrb[0].mxu0
      %v719 = vadd.f32 %v621, %v718
      %v720 = vpop.f32.mrb[0].mxu0
      %721 = vmatprep.mubr.f32.mxu0 0.0
      %722 = vmatmul.mubr.f32.gmra.mrb[0].mxu0 %v576
      %v723 = vpop.f32.mrb[0].mxu0
      %v724 = vadd.f32 %v621, %v723
      %v725 = vpop.f32.mrb[0].mxu0
      %726 = vmatprep.mubr.f32.mxu0 0.0
      %727 = vmatmul.mubr.f32.gmra.mrb[0].mxu0 %v577
      %v728 = vpop.f32.mrb[0].mxu0
      %v729 = vadd.f32 %v621, %v728
      %v730 = vpop.f32.mrb[0].mxu0
      %731 = vmatprep.mubr.f32.mxu0 0.0
      %732 = vmatmul.mubr.f32.gmra.mrb[0].mxu0 %v578
      %v733 = vpop.f32.mrb[0].mxu0
      %v734 = vadd.f32 %v621, %v733
      %v735 = vpop.f32.mrb[0].mxu0
      %736 = vmatprep.mubr.f32.mxu0 0.0
      %737 = vmatmul.mubr.f32.gmra.mrb[0].mxu0 %v579
      %v738 = vpop.f32.mrb[0].mxu0
      %v739 = vadd.f32 %v621, %v738
      %v740 = vpop.f32.mrb[0].mxu0
      %741 = vmatprep.mubr.f32.mxu0 0.0
      %742 = vmatmul.mubr.f32.gmra.mrb[0].mxu0 %v580
      %v743 = vpop.f32.mrb[0].mxu0
      %v744 = vadd.f32 %v621, %v743
      %v745 = vpop.f32.mrb[0].mxu0
      %746 = vmatprep.mubr.f32.mxu0 0.0
      %747 = vmatmul.mubr.f32.gmra.mrb[0].mxu0 %v581
      %v748 = vpop.f32.mrb[0].mxu0
      %v749 = vadd.f32 %v621, %v748
      %v750 = vpop.f32.mrb[0].mxu0
      %751 = vmatprep.mubr.f32.mxu0 0.0
      %752 = vmatmul.mubr.f32.gmra.mrb[0].mxu0 %v582
      %v753 = vpop.f32.mrb[0].mxu0
      %v754 = vadd.f32 %v621, %v753
      %v755 = vpop.f32.mrb[0].mxu0
      %756 = vmatprep.mubr.f32.mxu0 0.0
      %757 = vmatmul.mubr.f32.gmra.mrb[0].mxu0 %v583
      %v758 = vpop.f32.mrb[0].mxu0
      %v759 = vadd.f32 %v621, %v758
      %v760 = vpop.f32.mrb[0].mxu0
      %761 = vmatprep.mubr.f32.mxu0 0.0
      %762 = vmatmul.mubr.f32.gmra.mrb[0].mxu0 %v584
      %v763 = vpop.f32.mrb[0].mxu0
      %v764 = vadd.f32 %v621, %v763
      %v765 = vpop.f32.mrb[0].mxu0
      %766 = vmatprep.mubr.f32.mxu0 0.0
      %767 = vmatmul.mubr.f32.gmra.mrb[0].mxu0 %v585
      %v768 = vpop.f32.mrb[0].mxu0
      %v769 = vadd.f32 %v621, %v768
      %v770 = vpop.f32.mrb[0].mxu0
      %771 = vmatprep.mubr.f32.mxu0 0.0
      %772 = vmatmul.mubr.f32.gmra.mrb[0].mxu0 %v586
      %v773 = vpop.f32.mrb[0].mxu0
      %v774 = vadd.f32 %v621, %v773
      %v775 = vpop.f32.mrb[0].mxu0
      %776 = vmatprep.mubr.f32.mxu0 0.0
      %777 = vmatmul.mubr.f32.gmra.mrb[0].mxu0 %v587
      %v778 = vpop.f32.mrb[0].mxu0
      %v779 = vadd.f32 %v621, %v778
      %v780 = vpop.f32.mrb[0].mxu0
      %781 = vmatprep.mubr.f32.mxu0 0.0
      %782 = vmatmul.mubr.f32.gmra.mrb[0].mxu0 %v588
      %v783 = vpop.f32.mrb[0].mxu0
      %v784 = vadd.f32 %v621, %v783
      %v785 = vpop.f32.mrb[0].mxu0
      %786 = vmatprep.mubr.f32.mxu0 0.0
      %787 = vmatmul.mubr.f32.gmra.mrb[0].mxu0 %v589
      %v788 = vpop.f32.mrb[0].mxu0
      %v789 = vadd.f32 %v621, %v788
      %v790 = vpop.f32.mrb[0].mxu0
      %791 = vmatprep.mubr.f32.mxu0 0.0
      %792 = vmatmul.mubr.f32.gmra.mrb[0].mxu0 %v590
      %v793 = vpop.f32.mrb[0].mxu0
      %v794 = vadd.f32 %v621, %v793
      %v795 = vpop.f32.mrb[0].mxu0
      %796 = vmatprep.mubr.f32.mxu0 0.0
      %797 = vmatmul.mubr.f32.gmra.mrb[0].mxu0 %v591
      %v798 = vpop.f32.mrb[0].mxu0
      %v799 = vadd.f32 %v621, %v798
      %v800 = vpop.f32.mrb[0].mxu0
      %801 = vmatprep.mubr.f32.mxu0 0.0
      %802 = vmatmul.mubr.f32.gmra.mrb[0].mxu0 %v592
      %v803 = vpop.f32.mrb[0].mxu0
      %v804 = vadd.f32 %v621, %v803
      %v805 = vpop.f32.mrb[0].mxu0
      %806 = vmatprep.mubr.f32.mxu0 0.0
      %807 = vmatmul.mubr.f32.gmra.mrb[0].mxu0 %v593
      %v808 = vpop.f32.mrb[0].mxu0
      %v809 = vadd.f32 %v621, %v808
      %v810 = vpop.f32.mrb[0].mxu0
      %811 = vmatprep.mubr.f32.mxu0 0.0
      %812 = vmatmul.mubr.f32.gmra.mrb[0].mxu0 %v594
      %v813 = vpop.f32.mrb[0].mxu0
      %v814 = vadd.f32 %v621, %v813
      %v815 = vpop.f32.mrb[0].mxu0
      %816 = vmatprep.mubr.f32.mxu0 0.0
      %817 = vmatmul.mubr.f32.gmra.mrb[0].mxu0 %v595
      %v818 = vpop.f32.mrb[0].mxu0
      %v819 = vadd.f32 %v621, %v818
      %v820 = vpop.f32.mrb[0].mxu0
      %821 = vmatprep.mubr.f32.mxu0 0.0
      %822 = vmatmul.mubr.f32.gmra.mrb[0].mxu0 %v596
      %v823 = vpop.f32.mrb[0].mxu0
      %v824 = vadd.f32 %v621, %v823
      %v825 = vpop.f32.mrb[0].mxu0
      %826 = vmatprep.mubr.f32.mxu0 0.0
      %827 = vmatmul.mubr.f32.gmra.mrb[0].mxu0 %v597
      %v828 = vpop.f32.mrb[0].mxu0
      %v829 = vadd.f32 %v621, %v828
      %v830 = vpop.f32.mrb[0].mxu0
      %831 = vmatprep.mubr.f32.mxu0 0.0
      %832 = vmatmul.mubr.f32.gmra.mrb[0].mxu0 %v598
      %v833 = vpop.f32.mrb[0].mxu0
      %v834 = vadd.f32 %v621, %v833
      %v835 = vpop.f32.mrb[0].mxu0
      %836 = vmatprep.mubr.f32.mxu0 0.0
      %837 = vmatmul.mubr.f32.gmra.mrb[0].mxu0 %v599
      %v838 = vpop.f32.mrb[0].mxu0
      %v839 = vadd.f32 %v621, %v838
      %v840 = vpop.f32.mrb[0].mxu0
      %841 = vmatprep.mubr.f32.mxu0 0.0
      %842 = vmatmul.mubr.f32.gmra.mrb[0].mxu0 %v600
      %v843 = vpop.f32.mrb[0].mxu0
      %v844 = vadd.f32 %v621, %v843
      %v845 = vpop.f32.mrb[0].mxu0
      %846 = vdwg.mxu0
      %v847 = vmax.f32 %v689, 0.0
      %v848 = vmax.f32 %v694, 0.0
      %v849 = vmax.f32 %v699, 0.0
      %v850 = vmax.f32 %v704, 0.0
      %v851 = vmax.f32 %v709, 0.0
      %v852 = vmax.f32 %v714, 0.0
      %v853 = vmax.f32 %v719, 0.0
      %v854 = vmax.f32 %v724, 0.0
      %v855 = vmax.f32 %v729, 0.0
      %v856 = vmax.f32 %v734, 0.0
      %v857 = vmax.f32 %v739, 0.0
      %v858 = vmax.f32 %v744, 0.0
      %v859 = vmax.f32 %v749, 0.0
      %v860 = vmax.f32 %v754, 0.0
      %v861 = vmax.f32 %v759, 0.0
      %v862 = vmax.f32 %v764, 0.0
      %v863 = vmax.f32 %v769, 0.0
      %v864 = vmax.f32 %v774, 0.0
      %v865 = vmax.f32 %v779, 0.0
      %v866 = vmax.f32 %v784, 0.0
      %v867 = vmax.f32 %v789, 0.0
      %v868 = vmax.f32 %v794, 0.0
      %v869 = vmax.f32 %v799, 0.0
      %v870 = vmax.f32 %v804, 0.0
      %v871 = vmax.f32 %v809, 0.0
      %v872 = vmax.f32 %v814, 0.0
      %v873 = vmax.f32 %v819, 0.0
      %v874 = vmax.f32 %v824, 0.0
      %v875 = vmax.f32 %v829, 0.0
      %v876 = vmax.f32 %v834, 0.0
      %v877 = vmax.f32 %v839, 0.0
      %v878 = vmax.f32 %v844, 0.0
      %v879 = vld [vmem:[%s3] sm:$0xff]
      %v880 = vld [vmem:[%s3 + $0x8] sm:$0xff]
      %v881 = vld [vmem:[%s3 + $0x10] sm:$0xff]
      %v882 = vld [vmem:[%s3 + $0x18] sm:$0xff]
      %v883 = vld [vmem:[%s3 + $0x20] sm:$0xff]
      %v884 = vld [vmem:[%s3 + $0x28] sm:$0xff]
      %v885 = vld [vmem:[%s3 + $0x30] sm:$0xff]
      %v886 = vld [vmem:[%s3 + $0x38] sm:$0xff]
      %v887 = vld [vmem:[%s3 + $0x40] sm:$0xff]
      %v888 = vld [vmem:[%s3 + $0x48] sm:$0xff]
      %v889 = vld [vmem:[%s3 + $0x50] sm:$0xff]
      %v890 = vld [vmem:[%s3 + $0x58] sm:$0xff]
      %v891 = vld [vmem:[%s3 + $0x60] sm:$0xff]
      %v892 = vld [vmem:[%s3 + $0x68] sm:$0xff]
      %v893 = vld [vmem:[%s3 + $0x70] sm:$0xff]
      %v894 = vld [vmem:[%s3 + $0x78] sm:$0xff]
      %v895 = vld [vmem:[%s3 + $0x80] sm:$0x1]
      %v896 = vlaneseq
      %v897 = vshrl.u32 %v896, 7
      %v898 = vsub.s32 0, %v897
      %v899 = vrot.slane %v895, %v898
      %900 = vmatprep.subr.mxu0 0.0
      %901 = vmatpush1.msra.mxu0 %v879
      %902 = vmatprep.subr.mxu0 0.0
      %903 = vmatpush1.msra.mxu0 %v880
      %904 = vmatprep.subr.mxu0 0.0
      %905 = vmatpush1.msra.mxu0 %v881
      %906 = vmatprep.subr.mxu0 0.0
      %907 = vmatpush1.msra.mxu0 %v882
      %908 = vmatprep.subr.mxu0 0.0
      %909 = vmatpush1.msra.mxu0 %v883
      %910 = vmatprep.subr.mxu0 0.0
      %911 = vmatpush1.msra.mxu0 %v884
      %912 = vmatprep.subr.mxu0 0.0
      %913 = vmatpush1.msra.mxu0 %v885
      %914 = vmatprep.subr.mxu0 0.0
      %915 = vmatpush1.msra.mxu0 %v886
      %916 = vmatprep.subr.mxu0 0.0
      %917 = vmatpush1.msra.mxu0 %v887
      %918 = vmatprep.subr.mxu0 0.0
      %919 = vmatpush1.msra.mxu0 %v888
      %920 = vmatprep.subr.mxu0 0.0
      %921 = vmatpush1.msra.mxu0 %v889
      %922 = vmatprep.subr.mxu0 0.0
      %923 = vmatpush1.msra.mxu0 %v890
      %924 = vmatprep.subr.mxu0 0.0
      %925 = vmatpush1.msra.mxu0 %v891
      %926 = vmatprep.subr.mxu0 0.0
      %927 = vmatpush1.msra.mxu0 %v892
      %928 = vmatprep.subr.mxu0 0.0
      %929 = vmatpush1.msra.mxu0 %v893
      %930 = vmatprep.subr.mxu0 0.0
      %931 = vmatpush1.msra.mxu0 %v894
      %932 = vmatprep.subr.mxu0 0.0
      %933 = vmatpush1.msra.mxu0 0.0
      %934 = vmatprep.subr.mxu0 0.0
      %935 = vmatpush1.msra.mxu0 0.0
      %936 = vmatprep.subr.mxu0 0.0
      %937 = vmatpush1.msra.mxu0 0.0
      %938 = vmatprep.subr.mxu0 0.0
      %939 = vmatpush1.msra.mxu0 0.0
      %940 = vmatprep.subr.mxu0 0.0
      %941 = vmatpush1.msra.mxu0 0.0
      %942 = vmatprep.subr.mxu0 0.0
      %943 = vmatpush1.msra.mxu0 0.0
      %944 = vmatprep.subr.mxu0 0.0
      %945 = vmatpush1.msra.mxu0 0.0
      %946 = vmatprep.subr.mxu0 0.0
      %947 = vmatpush1.msra.mxu0 0.0
      %948 = vmatprep.subr.mxu0 0.0
      %949 = vmatpush1.msra.mxu0 0.0
      %950 = vmatprep.subr.mxu0 0.0
      %951 = vmatpush1.msra.mxu0 0.0
      %952 = vmatprep.subr.mxu0 0.0
      %953 = vmatpush1.msra.mxu0 0.0
      %954 = vmatprep.subr.mxu0 0.0
      %955 = vmatpush1.msra.mxu0 0.0
      %956 = vmatprep.subr.mxu0 0.0
      %957 = vmatpush1.msra.mxu0 0.0
      %958 = vmatprep.subr.mxu0 0.0
      %959 = vmatpush1.msra.mxu0 0.0
      %960 = vmatprep.subr.mxu0 0.0
      %961 = vmatpush1.msra.mxu0 0.0
      %962 = vmatprep.subr.mxu0 0.0
      %963 = vmatpush1.msra.mxu0 0.0
      %964 = vmatprep.mubr.f32.mxu0 0.0
      %965 = vmatmul.mubr.f32.gmra.mrb[0].mxu0 %v847
      %v966 = vpop.f32.mrb[0].mxu0
      %v967 = vadd.f32 %v899, %v966
      %v968 = vpop.f32.mrb[0].mxu0
      %969 = vmatprep.mubr.f32.mxu0 0.0
      %970 = vmatmul.mubr.f32.gmra.mrb[0].mxu0 %v848
      %v971 = vpop.f32.mrb[0].mxu0
      %v972 = vadd.f32 %v899, %v971
      %v973 = vpop.f32.mrb[0].mxu0
      %974 = vmatprep.mubr.f32.mxu0 0.0
      %975 = vmatmul.mubr.f32.gmra.mrb[0].mxu0 %v849
      %v976 = vpop.f32.mrb[0].mxu0
      %v977 = vadd.f32 %v899, %v976
      %v978 = vpop.f32.mrb[0].mxu0
      %979 = vmatprep.mubr.f32.mxu0 0.0
      %980 = vmatmul.mubr.f32.gmra.mrb[0].mxu0 %v850
      %v981 = vpop.f32.mrb[0].mxu0
      %v982 = vadd.f32 %v899, %v981
      %v983 = vpop.f32.mrb[0].mxu0
      %984 = vmatprep.mubr.f32.mxu0 0.0
      %985 = vmatmul.mubr.f32.gmra.mrb[0].mxu0 %v851
      %v986 = vpop.f32.mrb[0].mxu0
      %v987 = vadd.f32 %v899, %v986
      %v988 = vpop.f32.mrb[0].mxu0
      %989 = vmatprep.mubr.f32.mxu0 0.0
      %990 = vmatmul.mubr.f32.gmra.mrb[0].mxu0 %v852
      %v991 = vpop.f32.mrb[0].mxu0
      %v992 = vadd.f32 %v899, %v991
      %v993 = vpop.f32.mrb[0].mxu0
      %994 = vmatprep.mubr.f32.mxu0 0.0
      %995 = vmatmul.mubr.f32.gmra.mrb[0].mxu0 %v853
      %v996 = vpop.f32.mrb[0].mxu0
      %v997 = vadd.f32 %v899, %v996
      %v998 = vpop.f32.mrb[0].mxu0
      %999 = vmatprep.mubr.f32.mxu0 0.0
      %1000 = vmatmul.mubr.f32.gmra.mrb[0].mxu0 %v854
      %v1001 = vpop.f32.mrb[0].mxu0
      %v1002 = vadd.f32 %v899, %v1001
      %v1003 = vpop.f32.mrb[0].mxu0
      %1004 = vmatprep.mubr.f32.mxu0 0.0
      %1005 = vmatmul.mubr.f32.gmra.mrb[0].mxu0 %v855
      %v1006 = vpop.f32.mrb[0].mxu0
      %v1007 = vadd.f32 %v899, %v1006
      %v1008 = vpop.f32.mrb[0].mxu0
      %1009 = vmatprep.mubr.f32.mxu0 0.0
      %1010 = vmatmul.mubr.f32.gmra.mrb[0].mxu0 %v856
      %v1011 = vpop.f32.mrb[0].mxu0
      %v1012 = vadd.f32 %v899, %v1011
      %v1013 = vpop.f32.mrb[0].mxu0
      %1014 = vmatprep.mubr.f32.mxu0 0.0
      %1015 = vmatmul.mubr.f32.gmra.mrb[0].mxu0 %v857
      %v1016 = vpop.f32.mrb[0].mxu0
      %v1017 = vadd.f32 %v899, %v1016
      %v1018 = vpop.f32.mrb[0].mxu0
      %1019 = vmatprep.mubr.f32.mxu0 0.0
      %1020 = vmatmul.mubr.f32.gmra.mrb[0].mxu0 %v858
      %v1021 = vpop.f32.mrb[0].mxu0
      %v1022 = vadd.f32 %v899, %v1021
      %v1023 = vpop.f32.mrb[0].mxu0
      %1024 = vmatprep.mubr.f32.mxu0 0.0
      %1025 = vmatmul.mubr.f32.gmra.mrb[0].mxu0 %v859
      %v1026 = vpop.f32.mrb[0].mxu0
      %v1027 = vadd.f32 %v899, %v1026
      %v1028 = vpop.f32.mrb[0].mxu0
      %1029 = vmatprep.mubr.f32.mxu0 0.0
      %1030 = vmatmul.mubr.f32.gmra.mrb[0].mxu0 %v860
      %v1031 = vpop.f32.mrb[0].mxu0
      %v1032 = vadd.f32 %v899, %v1031
      %v1033 = vpop.f32.mrb[0].mxu0
      %1034 = vmatprep.mubr.f32.mxu0 0.0
      %1035 = vmatmul.mubr.f32.gmra.mrb[0].mxu0 %v861
      %v1036 = vpop.f32.mrb[0].mxu0
      %v1037 = vadd.f32 %v899, %v1036
      %v1038 = vpop.f32.mrb[0].mxu0
      %1039 = vmatprep.mubr.f32.mxu0 0.0
      %1040 = vmatmul.mubr.f32.gmra.mrb[0].mxu0 %v862
      %v1041 = vpop.f32.mrb[0].mxu0
      %v1042 = vadd.f32 %v899, %v1041
      %v1043 = vpop.f32.mrb[0].mxu0
      %1044 = vmatprep.mubr.f32.mxu0 0.0
      %1045 = vmatmul.mubr.f32.gmra.mrb[0].mxu0 %v863
      %v1046 = vpop.f32.mrb[0].mxu0
      %v1047 = vadd.f32 %v899, %v1046
      %v1048 = vpop.f32.mrb[0].mxu0
      %1049 = vmatprep.mubr.f32.mxu0 0.0
      %1050 = vmatmul.mubr.f32.gmra.mrb[0].mxu0 %v864
      %v1051 = vpop.f32.mrb[0].mxu0
      %v1052 = vadd.f32 %v899, %v1051
      %v1053 = vpop.f32.mrb[0].mxu0
      %1054 = vmatprep.mubr.f32.mxu0 0.0
      %1055 = vmatmul.mubr.f32.gmra.mrb[0].mxu0 %v865
      %v1056 = vpop.f32.mrb[0].mxu0
      %v1057 = vadd.f32 %v899, %v1056
      %v1058 = vpop.f32.mrb[0].mxu0
      %1059 = vmatprep.mubr.f32.mxu0 0.0
      %1060 = vmatmul.mubr.f32.gmra.mrb[0].mxu0 %v866
      %v1061 = vpop.f32.mrb[0].mxu0
      %v1062 = vadd.f32 %v899, %v1061
      %v1063 = vpop.f32.mrb[0].mxu0
      %1064 = vmatprep.mubr.f32.mxu0 0.0
      %1065 = vmatmul.mubr.f32.gmra.mrb[0].mxu0 %v867
      %v1066 = vpop.f32.mrb[0].mxu0
      %v1067 = vadd.f32 %v899, %v1066
      %v1068 = vpop.f32.mrb[0].mxu0
      %1069 = vmatprep.mubr.f32.mxu0 0.0
      %1070 = vmatmul.mubr.f32.gmra.mrb[0].mxu0 %v868
      %v1071 = vpop.f32.mrb[0].mxu0
      %v1072 = vadd.f32 %v899, %v1071
      %v1073 = vpop.f32.mrb[0].mxu0
      %1074 = vmatprep.mubr.f32.mxu0 0.0
      %1075 = vmatmul.mubr.f32.gmra.mrb[0].mxu0 %v869
      %v1076 = vpop.f32.mrb[0].mxu0
      %v1077 = vadd.f32 %v899, %v1076
      %v1078 = vpop.f32.mrb[0].mxu0
      %1079 = vmatprep.mubr.f32.mxu0 0.0
      %1080 = vmatmul.mubr.f32.gmra.mrb[0].mxu0 %v870
      %v1081 = vpop.f32.mrb[0].mxu0
      %v1082 = vadd.f32 %v899, %v1081
      %v1083 = vpop.f32.mrb[0].mxu0
      %1084 = vmatprep.mubr.f32.mxu0 0.0
      %1085 = vmatmul.mubr.f32.gmra.mrb[0].mxu0 %v871
      %v1086 = vpop.f32.mrb[0].mxu0
      %v1087 = vadd.f32 %v899, %v1086
      %v1088 = vpop.f32.mrb[0].mxu0
      %1089 = vmatprep.mubr.f32.mxu0 0.0
      %1090 = vmatmul.mubr.f32.gmra.mrb[0].mxu0 %v872
      %v1091 = vpop.f32.mrb[0].mxu0
      %v1092 = vadd.f32 %v899, %v1091
      %v1093 = vpop.f32.mrb[0].mxu0
      %1094 = vmatprep.mubr.f32.mxu0 0.0
      %1095 = vmatmul.mubr.f32.gmra.mrb[0].mxu0 %v873
      %v1096 = vpop.f32.mrb[0].mxu0
      %v1097 = vadd.f32 %v899, %v1096
      %v1098 = vpop.f32.mrb[0].mxu0
      %1099 = vmatprep.mubr.f32.mxu0 0.0
      %1100 = vmatmul.mubr.f32.gmra.mrb[0].mxu0 %v874
      %v1101 = vpop.f32.mrb[0].mxu0
      %v1102 = vadd.f32 %v899, %v1101
      %v1103 = vpop.f32.mrb[0].mxu0
      %1104 = vmatprep.mubr.f32.mxu0 0.0
      %1105 = vmatmul.mubr.f32.gmra.mrb[0].mxu0 %v875
      %v1106 = vpop.f32.mrb[0].mxu0
      %v1107 = vadd.f32 %v899, %v1106
      %v1108 = vpop.f32.mrb[0].mxu0
      %1109 = vmatprep.mubr.f32.mxu0 0.0
      %1110 = vmatmul.mubr.f32.gmra.mrb[0].mxu0 %v876
      %v1111 = vpop.f32.mrb[0].mxu0
      %v1112 = vadd.f32 %v899, %v1111
      %v1113 = vpop.f32.mrb[0].mxu0
      %1114 = vmatprep.mubr.f32.mxu0 0.0
      %1115 = vmatmul.mubr.f32.gmra.mrb[0].mxu0 %v877
      %v1116 = vpop.f32.mrb[0].mxu0
      %v1117 = vadd.f32 %v899, %v1116
      %v1118 = vpop.f32.mrb[0].mxu0
      %1119 = vmatprep.mubr.f32.mxu0 0.0
      %1120 = vmatmul.mubr.f32.gmra.mrb[0].mxu0 %v878
      %v1121 = vpop.f32.mrb[0].mxu0
      %v1122 = vadd.f32 %v899, %v1121
      %v1123 = vpop.f32.mrb[0].mxu0
      %1124 = vdwg.mxu0
      %v1125 = vxor.u32 %v967, 2147483648
      %v1126 = vxor.u32 %v972, 2147483648
      %v1127 = vxor.u32 %v977, 2147483648
      %v1128 = vxor.u32 %v982, 2147483648
      %v1129 = vxor.u32 %v987, 2147483648
      %v1130 = vxor.u32 %v992, 2147483648
      %v1131 = vxor.u32 %v997, 2147483648
      %v1132 = vxor.u32 %v1002, 2147483648
      %v1133 = vxor.u32 %v1007, 2147483648
      %v1134 = vxor.u32 %v1012, 2147483648
      %v1135 = vxor.u32 %v1017, 2147483648
      %v1136 = vxor.u32 %v1022, 2147483648
      %v1137 = vxor.u32 %v1027, 2147483648
      %v1138 = vxor.u32 %v1032, 2147483648
      %v1139 = vxor.u32 %v1037, 2147483648
      %v1140 = vxor.u32 %v1042, 2147483648
      %v1141 = vxor.u32 %v1047, 2147483648
      %v1142 = vxor.u32 %v1052, 2147483648
      %v1143 = vxor.u32 %v1057, 2147483648
      %v1144 = vxor.u32 %v1062, 2147483648
      %v1145 = vxor.u32 %v1067, 2147483648
      %v1146 = vxor.u32 %v1072, 2147483648
      %v1147 = vxor.u32 %v1077, 2147483648
      %v1148 = vxor.u32 %v1082, 2147483648
      %v1149 = vxor.u32 %v1087, 2147483648
      %v1150 = vxor.u32 %v1092, 2147483648
      %v1151 = vxor.u32 %v1097, 2147483648
      %v1152 = vxor.u32 %v1102, 2147483648
      %v1153 = vxor.u32 %v1107, 2147483648
      %v1154 = vxor.u32 %v1112, 2147483648
      %v1155 = vxor.u32 %v1117, 2147483648
      %v1156 = vxor.u32 %v1122, 2147483648
      %v1157 = vmul.f32 %v1125, 1.442695
      %v1158 = vpow.pop %v1157
      %v1159 = vmul.f32 %v1126, 1.442695
      %v1160 = vpow.pop %v1159
      %v1161 = vmul.f32 %v1127, 1.442695
      %v1162 = vpow.pop %v1161
      %v1163 = vmul.f32 %v1128, 1.442695
      %v1164 = vpow.pop %v1163
      %v1165 = vmul.f32 %v1129, 1.442695
      %v1166 = vpow.pop %v1165
      %v1167 = vmul.f32 %v1130, 1.442695
      %v1168 = vpow.pop %v1167
      %v1169 = vmul.f32 %v1131, 1.442695
      %v1170 = vpow.pop %v1169
      %v1171 = vmul.f32 %v1132, 1.442695
      %v1172 = vpow.pop %v1171
      %v1173 = vmul.f32 %v1133, 1.442695
      %v1174 = vpow.pop %v1173
      %v1175 = vmul.f32 %v1134, 1.442695
      %v1176 = vpow.pop %v1175
      %v1177 = vmul.f32 %v1135, 1.442695
      %v1178 = vpow.pop %v1177
      %v1179 = vmul.f32 %v1136, 1.442695
      %v1180 = vpow.pop %v1179
      %v1181 = vmul.f32 %v1137, 1.442695
      %v1182 = vpow.pop %v1181
      %v1183 = vmul.f32 %v1138, 1.442695
      %v1184 = vpow.pop %v1183
      %v1185 = vmul.f32 %v1139, 1.442695
      %v1186 = vpow.pop %v1185
      %v1187 = vmul.f32 %v1140, 1.442695
      %v1188 = vpow.pop %v1187
      %v1189 = vmul.f32 %v1141, 1.442695
      %v1190 = vpow.pop %v1189
      %v1191 = vmul.f32 %v1142, 1.442695
      %v1192 = vpow.pop %v1191
      %v1193 = vmul.f32 %v1143, 1.442695
      %v1194 = vpow.pop %v1193
      %v1195 = vmul.f32 %v1144, 1.442695
      %v1196 = vpow.pop %v1195
      %v1197 = vmul.f32 %v1145, 1.442695
      %v1198 = vpow.pop %v1197
      %v1199 = vmul.f32 %v1146, 1.442695
      %v1200 = vpow.pop %v1199
      %v1201 = vmul.f32 %v1147, 1.442695
      %v1202 = vpow.pop %v1201
      %v1203 = vmul.f32 %v1148, 1.442695
      %v1204 = vpow.pop %v1203
      %v1205 = vmul.f32 %v1149, 1.442695
      %v1206 = vpow.pop %v1205
      %v1207 = vmul.f32 %v1150, 1.442695
      %v1208 = vpow.pop %v1207
      %v1209 = vmul.f32 %v1151, 1.442695
      %v1210 = vpow.pop %v1209
      %v1211 = vmul.f32 %v1152, 1.442695
      %v1212 = vpow.pop %v1211
      %v1213 = vmul.f32 %v1153, 1.442695
      %v1214 = vpow.pop %v1213
      %v1215 = vmul.f32 %v1154, 1.442695
      %v1216 = vpow.pop %v1215
      %v1217 = vmul.f32 %v1155, 1.442695
      %v1218 = vpow.pop %v1217
      %v1219 = vmul.f32 %v1156, 1.442695
      %v1220 = vpow.pop %v1219
      %v1221 = vadd.f32 %v1158, 1.0
      %v1222 = vadd.f32 %v1160, 1.0
      %v1223 = vadd.f32 %v1162, 1.0
      %v1224 = vadd.f32 %v1164, 1.0
      %v1225 = vadd.f32 %v1166, 1.0
      %v1226 = vadd.f32 %v1168, 1.0
      %v1227 = vadd.f32 %v1170, 1.0
      %v1228 = vadd.f32 %v1172, 1.0
      %v1229 = vadd.f32 %v1174, 1.0
      %v1230 = vadd.f32 %v1176, 1.0
      %v1231 = vadd.f32 %v1178, 1.0
      %v1232 = vadd.f32 %v1180, 1.0
      %v1233 = vadd.f32 %v1182, 1.0
      %v1234 = vadd.f32 %v1184, 1.0
      %v1235 = vadd.f32 %v1186, 1.0
      %v1236 = vadd.f32 %v1188, 1.0
      %v1237 = vadd.f32 %v1190, 1.0
      %v1238 = vadd.f32 %v1192, 1.0
      %v1239 = vadd.f32 %v1194, 1.0
      %v1240 = vadd.f32 %v1196, 1.0
      %v1241 = vadd.f32 %v1198, 1.0
      %v1242 = vadd.f32 %v1200, 1.0
      %v1243 = vadd.f32 %v1202, 1.0
      %v1244 = vadd.f32 %v1204, 1.0
      %v1245 = vadd.f32 %v1206, 1.0
      %v1246 = vadd.f32 %v1208, 1.0
      %v1247 = vadd.f32 %v1210, 1.0
      %v1248 = vadd.f32 %v1212, 1.0
      %v1249 = vadd.f32 %v1214, 1.0
      %v1250 = vadd.f32 %v1216, 1.0
      %v1251 = vadd.f32 %v1218, 1.0
      %v1252 = vadd.f32 %v1220, 1.0
      %v1253 = vrcp.pop %v1221
      %v1254 = vmul.f32 1.0, %v1253
      %v1255 = vrcp.pop %v1222
      %v1256 = vmul.f32 1.0, %v1255
      %v1257 = vrcp.pop %v1223
      %v1258 = vmul.f32 1.0, %v1257
      %v1259 = vrcp.pop %v1224
      %v1260 = vmul.f32 1.0, %v1259
      %v1261 = vrcp.pop %v1225
      %v1262 = vmul.f32 1.0, %v1261
      %v1263 = vrcp.pop %v1226
      %v1264 = vmul.f32 1.0, %v1263
      %v1265 = vrcp.pop %v1227
      %v1266 = vmul.f32 1.0, %v1265
      %v1267 = vrcp.pop %v1228
      %v1268 = vmul.f32 1.0, %v1267
      %v1269 = vrcp.pop %v1229
      %v1270 = vmul.f32 1.0, %v1269
      %v1271 = vrcp.pop %v1230
      %v1272 = vmul.f32 1.0, %v1271
      %v1273 = vrcp.pop %v1231
      %v1274 = vmul.f32 1.0, %v1273
      %v1275 = vrcp.pop %v1232
      %v1276 = vmul.f32 1.0, %v1275
      %v1277 = vrcp.pop %v1233
      %v1278 = vmul.f32 1.0, %v1277
      %v1279 = vrcp.pop %v1234
      %v1280 = vmul.f32 1.0, %v1279
      %v1281 = vrcp.pop %v1235
      %v1282 = vmul.f32 1.0, %v1281
      %v1283 = vrcp.pop %v1236
      %v1284 = vmul.f32 1.0, %v1283
      %v1285 = vrcp.pop %v1237
      %v1286 = vmul.f32 1.0, %v1285
      %v1287 = vrcp.pop %v1238
      %v1288 = vmul.f32 1.0, %v1287
      %v1289 = vrcp.pop %v1239
      %v1290 = vmul.f32 1.0, %v1289
      %v1291 = vrcp.pop %v1240
      %v1292 = vmul.f32 1.0, %v1291
      %v1293 = vrcp.pop %v1241
      %v1294 = vmul.f32 1.0, %v1293
      %v1295 = vrcp.pop %v1242
      %v1296 = vmul.f32 1.0, %v1295
      %v1297 = vrcp.pop %v1243
      %v1298 = vmul.f32 1.0, %v1297
      %v1299 = vrcp.pop %v1244
      %v1300 = vmul.f32 1.0, %v1299
      %v1301 = vrcp.pop %v1245
      %v1302 = vmul.f32 1.0, %v1301
      %v1303 = vrcp.pop %v1246
      %v1304 = vmul.f32 1.0, %v1303
      %v1305 = vrcp.pop %v1247
      %v1306 = vmul.f32 1.0, %v1305
      %v1307 = vrcp.pop %v1248
      %v1308 = vmul.f32 1.0, %v1307
      %v1309 = vrcp.pop %v1249
      %v1310 = vmul.f32 1.0, %v1309
      %v1311 = vrcp.pop %v1250
      %v1312 = vmul.f32 1.0, %v1311
      %v1313 = vrcp.pop %v1251
      %v1314 = vmul.f32 1.0, %v1313
      %v1315 = vrcp.pop %v1252
      %v1316 = vmul.f32 1.0, %v1315
      %vm1317 = vcmask 23552
      %1318 = vst.msk [vmem:[%s199] sm:$0xff] %vm1317, %v1254
      %1319 = vst.msk [vmem:[%s199 + $0x8] sm:$0xff] %vm1317, %v1256
      %1320 = vst.msk [vmem:[%s199 + $0x10] sm:$0xff] %vm1317, %v1258
      %1321 = vst.msk [vmem:[%s199 + $0x18] sm:$0xff] %vm1317, %v1260
      %1322 = vst.msk [vmem:[%s199 + $0x20] sm:$0xff] %vm1317, %v1262
      %1323 = vst.msk [vmem:[%s199 + $0x28] sm:$0xff] %vm1317, %v1264
      %1324 = vst.msk [vmem:[%s199 + $0x30] sm:$0xff] %vm1317, %v1266
      %1325 = vst.msk [vmem:[%s199 + $0x38] sm:$0xff] %vm1317, %v1268
      %1326 = vst.msk [vmem:[%s199 + $0x40] sm:$0xff] %vm1317, %v1270
      %1327 = vst.msk [vmem:[%s199 + $0x48] sm:$0xff] %vm1317, %v1272
      %1328 = vst.msk [vmem:[%s199 + $0x50] sm:$0xff] %vm1317, %v1274
      %1329 = vst.msk [vmem:[%s199 + $0x58] sm:$0xff] %vm1317, %v1276
      %1330 = vst.msk [vmem:[%s199 + $0x60] sm:$0xff] %vm1317, %v1278
      %1331 = vst.msk [vmem:[%s199 + $0x68] sm:$0xff] %vm1317, %v1280
      %1332 = vst.msk [vmem:[%s199 + $0x70] sm:$0xff] %vm1317, %v1282
      %1333 = vst.msk [vmem:[%s199 + $0x78] sm:$0xff] %vm1317, %v1284
      %1334 = vst.msk [vmem:[%s199 + $0x80] sm:$0xff] %vm1317, %v1286
      %1335 = vst.msk [vmem:[%s199 + $0x88] sm:$0xff] %vm1317, %v1288
      %1336 = vst.msk [vmem:[%s199 + $0x90] sm:$0xff] %vm1317, %v1290
      %1337 = vst.msk [vmem:[%s199 + $0x98] sm:$0xff] %vm1317, %v1292
      %1338 = vst.msk [vmem:[%s199 + $0xa0] sm:$0xff] %vm1317, %v1294
      %1339 = vst.msk [vmem:[%s199 + $0xa8] sm:$0xff] %vm1317, %v1296
      %1340 = vst.msk [vmem:[%s199 + $0xb0] sm:$0xff] %vm1317, %v1298
      %1341 = vst.msk [vmem:[%s199 + $0xb8] sm:$0xff] %vm1317, %v1300
      %1342 = vst.msk [vmem:[%s199 + $0xc0] sm:$0xff] %vm1317, %v1302
      %1343 = vst.msk [vmem:[%s199 + $0xc8] sm:$0xff] %vm1317, %v1304
      %1344 = vst.msk [vmem:[%s199 + $0xd0] sm:$0xff] %vm1317, %v1306
      %1345 = vst.msk [vmem:[%s199 + $0xd8] sm:$0xff] %vm1317, %v1308
      %1346 = vst.msk [vmem:[%s199 + $0xe0] sm:$0xff] %vm1317, %v1310
      %1347 = vst.msk [vmem:[%s199 + $0xe8] sm:$0xff] %vm1317, %v1312
      %1348 = vst.msk [vmem:[%s199 + $0xf0] sm:$0xff] %vm1317, %v1314
      %1349 = vst.msk [vmem:[%s199 + $0xf8] sm:$0xff] %vm1317, %v1316
      %s1350 = smul.u32 32, %s15
      %p1351 = scmp.lt.s32.totalorder %s1350, 127
      %s1352 = scalar_select %p1351, %s1350, 127
      %s1353 = smul.addr %s1352, 8
      %s1354 = scalar_lea.vmem %s4, %s1353
      // Predicated region
      $region37: #{tpu_custom_call.1} parent=35 // pred_check
        %p1355 = pneg %p122
      $region38: #{tpu_custom_call.1} parent=35 // pred_check_branch
        %1357 = sbr.rel (%p1355) target = $region40
      $region39: #{tpu_custom_call.1} parent=35 // pred_region
        %s1358 = smul.u32 32, %s15
      $region40: #{tpu_custom_call.1} parent=35 // pred_fallthru
        _
    $region36: #{tpu_custom_call.1} parent=5 // pred_fallthru
      _
    %p1359 = scmp.le.s32.totalorder 2, %s10
    // Predicated region
    $region41: #{tpu_custom_call.1} parent=5 // pred_check
      %p1360 = pneg %p1359
    $region42: #{tpu_custom_call.1} parent=5 // pred_check_branch
      %1362 = sbr.rel (%p1360) target = $region44
    $region43: #{tpu_custom_call.1} parent=5 // pred_region
      %s1363 = ssub.s32 %s10, 2
      // Predicated region
      $region45: #{tpu_custom_call.1} parent=43 // pred_check
        %p1364 = pneg %p128
      $region46: #{tpu_custom_call.1} parent=43 // pred_check_branch
        %1366 = sbr.rel (%p1364) target = $region48
      $region47: #{tpu_custom_call.1} parent=43 // pred_region
        %s1367 = smul.u32 32, %s16
        %p1368 = scmp.lt.s32.totalorder %s1367, 127
        %s1369 = scalar_select %p1368, %s1367, 127
        %s1370 = smul.addr %s1369, 8
        %s1371 = scalar_lea.vmem %s4, %s1370
      $region48: #{tpu_custom_call.1} parent=43 // pred_fallthru
        _
    $region44: #{tpu_custom_call.1} parent=5 // pred_fallthru
      _
  $region6: #{tpu_custom_call.1} parent=0 // loop_footer
    %s14 = sadd.s32 1, %s10
  $region7: #{tpu_custom_call.1} parent=0 // loop_footer_branch
    %9 = sbr.rel target = $region3
  $region8: #{tpu_custom_call.1} parent=0 // loop_exit
    _

</llo_original>
